<compile_context>
chip_gen: v6e
topology: v6e:2x2x1
jax: 0.10.0
libtpu: 0.0.40
codegen_flags: <defaults>
</compile_context>

<pallas_src>
import jax
import jax.numpy as jnp
from jax.experimental import pallas as pl
from jax.experimental.pallas import tpu as pltpu


def _channel_attention_kernel(x_ref, w1_ref, w2_ref, o_ref):
    # x_ref : (C, HW)   one batch element (batch dim squeezed away)
    # w1_ref: (Cr, C)   first 1x1 conv weight  (out, in)
    # w2_ref: (C, Cr)   second 1x1 conv weight (out, in)
    x = x_ref[...]                                   # stays in input dtype

    # Global pools over the spatial (lane) axis, accumulated in f32.
    xf = x.astype(jnp.float32)
    avg = jnp.mean(xf, axis=-1, keepdims=True)       # (C, 1)
    mx = jnp.max(xf, axis=-1, keepdims=True)         # (C, 1)
    p = jnp.concatenate([avg, mx], axis=-1)          # (C, 2): [avg | max] columns

    w1 = w1_ref[...].astype(jnp.float32)             # (Cr, C)
    w2 = w2_ref[...].astype(jnp.float32)             # (C, Cr)

    # Fused FC: one pass for both pooled vectors (columns), no transposes.
    h = jnp.dot(w1, p, preferred_element_type=jnp.float32)       # (Cr, 2)
    h = jnp.maximum(h, 0.0)                                      # ReLU
    f = jnp.dot(w2, h, preferred_element_type=jnp.float32)       # (C, 2)

    # sigmoid(fc(avg) + fc(max)) == sigmoid(col0 + col1)
    att = jax.nn.sigmoid(f[:, 0:1] + f[:, 1:2])                  # (C, 1)

    # Gate in the input dtype (broadcast along lanes).
    o_ref[...] = (x * att.astype(x.dtype)).astype(o_ref.dtype)


def channel_attention(x_nchw, w1, w2):
    """x_nchw: (N, C, H, W); w1: (C//16, C); w2: (C, C//16)."""
    N, C, H, W = x_nchw.shape
    HW = H * W
    Cr = w1.shape[0]
    x_flat = x_nchw.reshape(N, C, HW)

    itemsize = jnp.dtype(x_nchw.dtype).itemsize
    block_bytes = C * HW * itemsize
    weight_bytes = (w1.size + w2.size) * jnp.dtype(w1.dtype).itemsize
    # input + output, double-buffered, plus weights and small temps/headroom.
    vmem_need = 4 * block_bytes + 2 * weight_bytes + (1 << 20)

    cp_kwargs = dict(dimension_semantics=("parallel",))
    if vmem_need > (32 << 20):
        # Raise the scoped VMEM limit only when the default would force a
        # refusal; cap well below v6e/v5e physical (128 MiB).
        cp_kwargs["vmem_limit_bytes"] = int(min(vmem_need, 100 << 20))

    cost = pl.CostEstimate(
        flops=int(N * (2 * C * HW + 8 * C * Cr)),
        transcendentals=int(N * C),
        bytes_accessed=int(2 * N * C * HW * itemsize + weight_bytes),
    )

    out_flat = pl.pallas_call(
        _channel_attention_kernel,
        out_shape=jax.ShapeDtypeStruct((N, C, HW), x_nchw.dtype),
        grid_spec=pltpu.PrefetchScalarGridSpec(
            num_scalar_prefetch=0,
            grid=(N,),
            in_specs=[
                pl.BlockSpec((pl.Squeezed(), C, HW), lambda n: (n, 0, 0)),
                pl.BlockSpec((Cr, C), lambda n: (0, 0)),
                pl.BlockSpec((C, Cr), lambda n: (0, 0)),
            ],
            out_specs=pl.BlockSpec((pl.Squeezed(), C, HW), lambda n: (n, 0, 0)),
        ),
        compiler_params=pltpu.CompilerParams(**cp_kwargs),
        cost_estimate=cost,
    )(x_flat, w1, w2)

    return out_flat.reshape(N, C, H, W)


def _reference(x, w1, w2):
    # Pure-JAX reference of the PyTorch forward (NCHW).
    xf = x.astype(jnp.float32)
    avg = jnp.mean(xf, axis=(2, 3))            # (N, C)
    mx = jnp.max(xf, axis=(2, 3))              # (N, C)

    def fc(p):
        h = jnp.maximum(p @ w1.T.astype(jnp.float32), 0.0)
        return h @ w2.T.astype(jnp.float32)

    att = jax.nn.sigmoid(fc(avg) + fc(mx))     # (N, C)
    return (xf * att[:, :, None, None]).astype(x.dtype)


if __name__ == "__main__":
    # in_planes must be divisible by 16 (the fc hard-codes //16): C=32 -> Cr=2.
    N, C, H, W = 2, 32, 16, 16
    Cr = C // 16

    key = jax.random.PRNGKey(0)
    kx, k1, k2 = jax.random.split(key, 3)
    x = jax.random.normal(kx, (N, C, H, W), dtype=jnp.float32)
    # Conv2d 1x1, bias=False -> plain (out, in) matrices.
    w1 = jax.random.normal(k1, (Cr, C), dtype=jnp.float32) * 0.1
    w2 = jax.random.normal(k2, (C, Cr), dtype=jnp.float32) * 0.1

    out = channel_attention(x, w1, w2)
    out = jax.block_until_ready(out)

    ref = _reference(x, w1, w2)
    assert out.shape == (N, C, H, W)
    assert jnp.allclose(out, ref, atol=1e-5, rtol=1e-5), "mismatch vs reference"

    print("KERNEL_OK")
</pallas_src>

<mosaic_0001>
module attributes {stable_mosaic.version = 11 : i64} {
  func.func @_channel_attention_kernel(%arg0: i32, %arg1: memref<1x32x256xf32, #tpu.memory_space<vmem>>, %arg2: memref<2x32xf32, #tpu.memory_space<vmem>>, %arg3: memref<32x2xf32, #tpu.memory_space<vmem>>, %arg4: memref<1x32x256xf32, #tpu.memory_space<vmem>>) attributes {dimension_semantics = [#tpu.dimension_semantics<parallel>], iteration_bounds = array<i64: 2>, scalar_prefetch = 0 : i64, scratch_operands = 0 : i64, tpu.core_type = #tpu.core_type<tc>, window_params = [{transform_indices = @transform_0, window_bounds = array<i64: 1, 32, 256>}, {pipeline_mode = #tpu.pipeline_mode<synchronous>, transform_indices = @transform_1, window_bounds = array<i64: 2, 32>}, {pipeline_mode = #tpu.pipeline_mode<synchronous>, transform_indices = @transform_2, window_bounds = array<i64: 32, 2>}, {transform_indices = @transform_3, window_bounds = array<i64: 1, 32, 256>}]} {
    %c0 = arith.constant 0 : index
    %c0_0 = arith.constant 0 : index
    %c0_1 = arith.constant 0 : index
    %0 = vector.load %arg1[%c0, %c0_0, %c0_1] : memref<1x32x256xf32, #tpu.memory_space<vmem>>, vector<1x32x256xf32>
    %1 = vector.shape_cast %0 : vector<1x32x256xf32> to vector<32x256xf32>
    %cst = arith.constant dense<0.000000e+00> : vector<32xf32>
    %2 = vector.multi_reduction <add>, %1, %cst [1] : vector<32x256xf32> to vector<32xf32>
    %3 = vector.shape_cast %2 : vector<32xf32> to vector<32x1xf32>
    %cst_2 = arith.constant 2.560000e+02 : f32
    %4 = vector.broadcast %cst_2 : f32 to vector<32x1xf32>
    %5 = arith.divf %3, %4 : vector<32x1xf32>
    %cst_3 = arith.constant dense<0xFF800000> : vector<32xf32>
    %6 = vector.multi_reduction <maximumf>, %1, %cst_3 [1] : vector<32x256xf32> to vector<32xf32>
    %7 = vector.shape_cast %6 : vector<32xf32> to vector<32x1xf32>
    %8 = tpu.concatenate %5, %7 in 1 : vector<32x1xf32>, vector<32x1xf32> -> vector<32x2xf32>
    %c0_4 = arith.constant 0 : index
    %c0_5 = arith.constant 0 : index
    %9 = vector.load %arg2[%c0_4, %c0_5] : memref<2x32xf32, #tpu.memory_space<vmem>>, vector<2x32xf32>
    %c0_6 = arith.constant 0 : index
    %c0_7 = arith.constant 0 : index
    %10 = vector.load %arg3[%c0_6, %c0_7] : memref<32x2xf32, #tpu.memory_space<vmem>>, vector<32x2xf32>
    %cst_8 = arith.constant dense<0.000000e+00> : vector<2x2xf32>
    %11 = tpu.matmul %9, %8, %cst_8 {dimension_numbers = #tpu.dot_dimension_numbers<[1], [0], [0], [1], [0, 0, 1, 1], [], []>} : vector<2x32xf32>, vector<32x2xf32>, vector<2x2xf32> -> vector<2x2xf32>
    %cst_9 = arith.constant 0.000000e+00 : f32
    %12 = vector.broadcast %cst_9 : f32 to vector<2x2xf32>
    %13 = arith.maximumf %11, %12 : vector<2x2xf32>
    %cst_10 = arith.constant dense<0.000000e+00> : vector<32x2xf32>
    %14 = tpu.matmul %10, %13, %cst_10 {dimension_numbers = #tpu.dot_dimension_numbers<[1], [0], [0], [1], [0, 0, 1, 1], [], []>} : vector<32x2xf32>, vector<2x2xf32>, vector<32x2xf32> -> vector<32x2xf32>
    %15 = vector.extract_strided_slice %14 {offsets = [0, 0], sizes = [32, 1], strides = [1, 1]} : vector<32x2xf32> to vector<32x1xf32>
    %16 = vector.extract_strided_slice %14 {offsets = [0, 1], sizes = [32, 1], strides = [1, 1]} : vector<32x2xf32> to vector<32x1xf32>
    %17 = arith.addf %15, %16 : vector<32x1xf32>
    %18 = arith.negf %17 : vector<32x1xf32>
    %19 = math.exp %18 : vector<32x1xf32>
    %cst_11 = arith.constant 1.000000e+00 : f32
    %20 = vector.broadcast %cst_11 : f32 to vector<32x1xf32>
    %21 = arith.addf %20, %19 : vector<32x1xf32>
    %22 = arith.divf %20, %21 : vector<32x1xf32>
    %23 = vector.broadcast %22 : vector<32x1xf32> to vector<32x256xf32>
    %24 = arith.mulf %1, %23 : vector<32x256xf32>
    %c0_12 = arith.constant 0 : index
    %c0_13 = arith.constant 0 : index
    %c0_14 = arith.constant 0 : index
    %25 = vector.load %arg4[%c0_12, %c0_13, %c0_14] : memref<1x32x256xf32, #tpu.memory_space<vmem>>, vector<1x32x256xf32>
    %26 = vector.shape_cast %25 : vector<1x32x256xf32> to vector<32x256xf32>
    %27 = vector.shape_cast %24 : vector<32x256xf32> to vector<1x32x256xf32>
    tpu.vector_store %arg4[%c0_12, %c0_13, %c0_14], %27 {strides = array<i32>} : memref<1x32x256xf32, #tpu.memory_space<vmem>>, vector<1x32x256xf32>,
    return
  }
  func.func @transform_0(%arg0: i32) -> (i32, i32, i32) {
    %c0_i32 = arith.constant 0 : i32
    %c0_i32_0 = arith.constant 0 : i32
    %c0_i32_1 = arith.constant 0 : i32
    return %arg0, %c0_i32, %c0_i32_0 : i32, i32, i32
  }
  func.func @transform_1(%arg0: i32) -> (i32, i32) {
    %c0_i32 = arith.constant 0 : i32
    %c0_i32_0 = arith.constant 0 : i32
    %c0_i32_1 = arith.constant 0 : i32
    return %c0_i32, %c0_i32_0 : i32, i32
  }
  func.func @transform_2(%arg0: i32) -> (i32, i32) {
    %c0_i32 = arith.constant 0 : i32
    %c0_i32_0 = arith.constant 0 : i32
    %c0_i32_1 = arith.constant 0 : i32
    return %c0_i32, %c0_i32_0 : i32, i32
  }
  func.func @transform_3(%arg0: i32) -> (i32, i32, i32) {
    %c0_i32 = arith.constant 0 : i32
    %c0_i32_0 = arith.constant 0 : i32
    %c0_i32_1 = arith.constant 0 : i32
    return %arg0, %c0_i32, %c0_i32_0 : i32, i32, i32
  }
}

</mosaic_0001>

<llo_original>
// kernel: tpu_custom_call.1
$region0: #{tpu_custom_call.1}
  #allocation0 [shape = 'u32[]', space=smem, size = 0x4, offset = 0x4, fixed_abs, tag = 'smem constant byte address 0x4 - core index']
  #allocation1 [shape = 'u32[144,128]{1,0:T(1,128)}', space=vmem, size = 0x12000, scoped, tag = 'internal scratch']
  %s0 = inlined_call_operand.hbm [shape: f32[2,32,256], index: 0, kind: input, shape index: {}]
  %s1 = inlined_call_operand.vmem [shape: f32[2,32], index: 1, kind: input, shape index: {}]
  %s2 = inlined_call_operand.vmem [shape: f32[32,2], index: 2, kind: input, shape index: {}]
  %s3 = inlined_call_operand.hbm [shape: f32[2,32,256], index: 3, kind: output, shape index: {}]
  %s4 = sld [smem:[#allocation0]]
  $region49: #{tpu_custom_call.1} parent=0
    _
  %s6 = ssub.s32 1, %s4
  %s7 = scalar_select 0, %s6, %s4
  $region1: #{tpu_custom_call.1} parent=0
    #allocation2 [shape = 'u8[65536]{0}', space=vmem, size = 0x10000, scoped, tag = 'input window, operand 0']
    #allocation3 [shape = 's32[2]{0}', space=sflag, size = 0x8, scoped, tag = 'scoped memory for tpu_custom_call.1']
    #allocation4 [shape = 's32[2]{0}', space=sflag, size = 0x8, scoped, tag = 'scoped memory for tpu_custom_call.1']
    #allocation5 [shape = 'u8[65536]{0}', space=vmem, size = 0x10000, scoped, tag = 'output window, operand 0']
    %8 = vsyncpa [#allocation3], 0
    %s9 = scalar_lea.sflag [#allocation3], 1
    %10 = vsyncpa %s9, 0
    %11 = vsyncpa [#allocation4], 0
    %s12 = scalar_lea.sflag [#allocation4], 1
    %13 = vsyncpa %s12, 0
    loop: start=0, step=1, limit=4
    $region2: #{tpu_custom_call.1} parent=1 // loop_pre_header
      _
    $region3: #{tpu_custom_call.1} parent=1 // loop_header
      %s15 = sphi 0, %s19
      %p16 = scmp.ge.s32.totalorder %s15, 4
      %s25 = sphi 0, %s27
      %s28 = sphi 0, %s25
      %s29 = sphi 0, %s28
      %s45 = sphi 0, %s29
      %s49 = sphi 0, %s49
      %s51 = sphi 0, %s49
      %s52 = sphi 0, %s51
      %s66 = sphi 0, %s52
      %s70 = sphi 0, %s70
      %s72 = sphi 0, %s70
      %s73 = sphi 0, %s72
      %s87 = sphi 0, %s73
      %s93 = sphi 0, %s95
      %s96 = sphi 0, %s93
      %s97 = sphi 0, %s96
      %s113 = sphi 0, %s97
    $region4: #{tpu_custom_call.1} parent=1 // loop_header_branch
      %18 = sbr.rel (%p16) target = $region8
    $region5: #{tpu_custom_call.1} parent=1 // loop_body
      %s20 = ssub.s32 %s15, 1
      %s21 = ssub.s32 %s15, 2
      %s22 = sadd.s32 %s15, 1
      %s23 = ssub.s32 %s15, %s22
      %p24 = scmp.eq.s32.totalorder %s23, 0
      %s26 = sadd.s32 %s25, 1
      %s27 = scalar_select %p24, %s25, %s26
      %p30 = pneg %p24
      %p31 = scmp.eq.s32.totalorder %s15, 1
      %p32 = por %p30, %p31
      %p33 = scmp.ne.s32.totalorder %s25, %s28
      %p34 = scmp.eq.s32.totalorder %s15, 0
      %p35 = por %p33, %p34
      %p36 = scmp.ne.s32.totalorder %s25, %s28
      %p37 = scmp.eq.s32.totalorder %s20, 1
      %p38 = por %p36, %p37
      %p39 = scmp.ne.s32.totalorder %s28, %s29
      %p40 = scmp.eq.s32.totalorder %s20, 0
      %p41 = por %p39, %p40
      %p42 = scmp.ne.s32.totalorder %s28, %s29
      %p43 = scmp.eq.s32.totalorder %s21, 1
      %p44 = por %p42, %p43
      %p46 = scmp.ne.s32.totalorder %s29, %s45
      %p47 = scmp.eq.s32.totalorder %s21, 0
      %p48 = por %p46, %p47
      %s50 = sadd.s32 %s49, 1
      %p53 = scmp.eq.s32.totalorder %s15, 1
      %p54 = scmp.ne.s32.totalorder %s49, %s51
      %p55 = scmp.eq.s32.totalorder %s15, 0
      %p56 = por %p54, %p55
      %p57 = scmp.ne.s32.totalorder %s49, %s51
      %p58 = scmp.eq.s32.totalorder %s20, 1
      %p59 = por %p57, %p58
      %p60 = scmp.ne.s32.totalorder %s51, %s52
      %p61 = scmp.eq.s32.totalorder %s20, 0
      %p62 = por %p60, %p61
      %p63 = scmp.ne.s32.totalorder %s51, %s52
      %p64 = scmp.eq.s32.totalorder %s21, 1
      %p65 = por %p63, %p64
      %p67 = scmp.ne.s32.totalorder %s52, %s66
      %p68 = scmp.eq.s32.totalorder %s21, 0
      %p69 = por %p67, %p68
      %s71 = sadd.s32 %s70, 1
      %p74 = scmp.eq.s32.totalorder %s15, 1
      %p75 = scmp.ne.s32.totalorder %s70, %s72
      %p76 = scmp.eq.s32.totalorder %s15, 0
      %p77 = por %p75, %p76
      %p78 = scmp.ne.s32.totalorder %s70, %s72
      %p79 = scmp.eq.s32.totalorder %s20, 1
      %p80 = por %p78, %p79
      %p81 = scmp.ne.s32.totalorder %s72, %s73
      %p82 = scmp.eq.s32.totalorder %s20, 0
      %p83 = por %p81, %p82
      %p84 = scmp.ne.s32.totalorder %s72, %s73
      %p85 = scmp.eq.s32.totalorder %s21, 1
      %p86 = por %p84, %p85
      %p88 = scmp.ne.s32.totalorder %s73, %s87
      %p89 = scmp.eq.s32.totalorder %s21, 0
      %p90 = por %p88, %p89
      %s91 = ssub.s32 %s15, %s22
      %p92 = scmp.eq.s32.totalorder %s91, 0
      %s94 = sadd.s32 %s93, 1
      %s95 = scalar_select %p92, %s93, %s94
      %p98 = pneg %p92
      %p99 = scmp.eq.s32.totalorder %s15, 1
      %p100 = por %p98, %p99
      %p101 = scmp.ne.s32.totalorder %s93, %s96
      %p102 = scmp.eq.s32.totalorder %s15, 0
      %p103 = por %p101, %p102
      %p104 = scmp.ne.s32.totalorder %s93, %s96
      %p105 = scmp.eq.s32.totalorder %s20, 1
      %p106 = por %p104, %p105
      %p107 = scmp.ne.s32.totalorder %s96, %s97
      %p108 = scmp.eq.s32.totalorder %s20, 0
      %p109 = por %p107, %p108
      %p110 = scmp.ne.s32.totalorder %s96, %s97
      %p111 = scmp.eq.s32.totalorder %s21, 1
      %p112 = por %p110, %p111
      %p114 = scmp.ne.s32.totalorder %s97, %s113
      %p115 = scmp.eq.s32.totalorder %s21, 0
      %p116 = por %p114, %p115
      %p117 = scmp.le.s32.totalorder 1, %s15
      %p118 = scmp.lt.s32.totalorder %s15, 3
      %p119 = pnand %p117, %p118
      %p120 = pneg %p119
      // Predicated region
      $region9: #{tpu_custom_call.1} parent=5 // pred_check
        _
      $region10: #{tpu_custom_call.1} parent=5 // pred_check_branch
        %122 = sbr.rel (%p119) target = $region12
      $region11: #{tpu_custom_call.1} parent=5 // pred_region
        %s123 = ssub.s32 %s15, 1
        // Predicated region
        $region13: #{tpu_custom_call.1} parent=11 // pred_check
          %p124 = pneg %p62
        $region14: #{tpu_custom_call.1} parent=11 // pred_check_branch
          %126 = sbr.rel (%p124) target = $region16
        $region15: #{tpu_custom_call.1} parent=11 // pred_region
          _
        $region16: #{tpu_custom_call.1} parent=11 // pred_fallthru
          _
        // Predicated region
        $region17: #{tpu_custom_call.1} parent=11 // pred_check
          %p127 = pneg %p83
        $region18: #{tpu_custom_call.1} parent=11 // pred_check_branch
          %129 = sbr.rel (%p127) target = $region20
        $region19: #{tpu_custom_call.1} parent=11 // pred_region
          _
        $region20: #{tpu_custom_call.1} parent=11 // pred_fallthru
          _
      $region12: #{tpu_custom_call.1} parent=5 // pred_fallthru
        _
      %p130 = scmp.lt.s32.totalorder %s15, 2
      // Predicated region
      $region21: #{tpu_custom_call.1} parent=5 // pred_check
        %p131 = pneg %p130
      $region22: #{tpu_custom_call.1} parent=5 // pred_check_branch
        %133 = sbr.rel (%p131) target = $region24
      $region23: #{tpu_custom_call.1} parent=5 // pred_region
        // Predicated region
        $region25: #{tpu_custom_call.1} parent=23 // pred_check
          %p134 = pneg %p35
        $region26: #{tpu_custom_call.1} parent=23 // pred_check_branch
          %136 = sbr.rel (%p134) target = $region28
        $region27: #{tpu_custom_call.1} parent=23 // pred_region
          %s137 = sand.u32 %s25, 1
          %s138 = scalar_lea.sflag [#allocation3], %s137
          %s139 = sand.u32 %s25, 1
          %s140 = smul.addr %s139, 64
          %s141 = scalar_lea.vmem [#allocation2], %s140
          %s143 = ssub.s32 1024, 1024
          %144 = vsyncadd %s138, %s143
          %s145 = smul.addr %s15, 8
          %s146 = smul.addr %s145, 128
          %s147 = scalar_lea.hbm %s0, %s146
          %s148 = sshll.u32 %s141, 4
          %s149 = int_to_ptr.vmem [resolvable:$true] %s148
          %154 = dma.hbm_to_vmem [thread:$0]  %s147, 1024, %s149, %s138, 256, 256, 16
        $region28: #{tpu_custom_call.1} parent=23 // pred_fallthru
          _
      $region24: #{tpu_custom_call.1} parent=5 // pred_fallthru
        _
      %p155 = scmp.le.s32.totalorder 1, %s15
      %p156 = scmp.lt.s32.totalorder %s15, 3
      %p157 = pnand %p155, %p156
      %p158 = pneg %p157
      // Predicated region
      $region29: #{tpu_custom_call.1} parent=5 // pred_check
        _
      $region30: #{tpu_custom_call.1} parent=5 // pred_check_branch
        %160 = sbr.rel (%p157) target = $region32
      $region31: #{tpu_custom_call.1} parent=5 // pred_region
        %s161 = ssub.s32 %s15, 1
        %s162 = sand.u32 %s28, 1
        %s163 = scalar_lea.sflag [#allocation3], %s162
        %s164 = sand.u32 %s28, 1
        %s165 = smul.addr %s164, 64
        %s166 = scalar_lea.vmem [#allocation2], %s165
        // Predicated region
        $region33: #{tpu_custom_call.1} parent=31 // pred_check
          %p167 = pneg %p41
        $region34: #{tpu_custom_call.1} parent=31 // pred_check_branch
          %169 = sbr.rel (%p167) target = $region36
        $region35: #{tpu_custom_call.1} parent=31 // pred_region
          %170 = dma.done %s163, 1024
        $region36: #{tpu_custom_call.1} parent=31 // pred_fallthru
          _
        %s171 = sand.u32 %s28, 1
        %s172 = scalar_lea.sflag [#allocation3], %s171
        %s173 = sand.u32 %s28, 1
        %s174 = smul.addr %s173, 64
        %s175 = scalar_lea.vmem [#allocation2], %s174
        %p176 = pneg %p41
        %p177 = pneg %p38
        %p178 = pneg %p62
        %p179 = pneg %p59
        %p180 = pneg %p83
        %p181 = pneg %p80
        %p182 = pneg %p109
        %p183 = pneg %p106
        %s184 = sand.u32 %s96, 1
        %s185 = scalar_lea.sflag [#allocation4], %s184
        %s186 = sand.u32 %s96, 1
        %s187 = smul.addr %s186, 64
        %s188 = scalar_lea.vmem [#allocation5], %s187
        %v189 = vld [vmem:[%s166] sm:$0xff]
        %v190 = vld [vmem:[%s166 + $0x8] sm:$0xff]
        %v191 = vld [vmem:[%s166 + $0x10] sm:$0xff]
        %v192 = vld [vmem:[%s166 + $0x18] sm:$0xff]
        %v193 = vld [vmem:[%s166 + $0x20] sm:$0xff]
        %v194 = vld [vmem:[%s166 + $0x28] sm:$0xff]
        %v195 = vld [vmem:[%s166 + $0x30] sm:$0xff]
        %v196 = vld [vmem:[%s166 + $0x38] sm:$0xff]
        %v197 = vadd.f32 %v189, %v190
        %198 = vadd.xlane.f32.xlu0 %v197
        %v199 = vpop.xlane.xlu0 %198
        %v200 = vadd.f32 %v191, %v192
        %201 = vadd.xlane.f32.xlu0 %v200
        %v202 = vpop.xlane.xlu0 %201
        %v203 = vadd.f32 %v193, %v194
        %204 = vadd.xlane.f32.xlu0 %v203
        %v205 = vpop.xlane.xlu0 %204
        %v206 = vadd.f32 %v195, %v196
        %207 = vadd.xlane.f32.xlu0 %v206
        %v208 = vpop.xlane.xlu0 %207
        %v209 = vrcp.pop 256.0
        %v210 = vmul.f32 %v199, %v209
        %v211 = vmul.f32 %v202, %v209
        %v212 = vmul.f32 %v205, %v209
        %v213 = vmul.f32 %v208, %v209
        %v214 = vmax.f32 %v189, %v190
        %215 = vmax.xlane.f32.xlu0 %v214
        %v216 = vpop.xlane.xlu0 %215
        %v217 = vmax.f32 %v191, %v192
        %218 = vmax.xlane.f32.xlu0 %v217
        %v219 = vpop.xlane.xlu0 %218
        %v220 = vmax.f32 %v193, %v194
        %221 = vmax.xlane.f32.xlu0 %v220
        %v222 = vpop.xlane.xlu0 %221
        %v223 = vmax.f32 %v195, %v196
        %224 = vmax.xlane.f32.xlu0 %v223
        %v225 = vpop.xlane.xlu0 %224
        %vm226 = vcmask 7168
        %v227 = vsel %vm226, %v210, %v216
        %v228 = vsel %vm226, %v211, %v219
        %v229 = vsel %vm226, %v212, %v222
        %v230 = vsel %vm226, %v213, %v225
        %v231 = vld [vmem:[%s1] sm:$0x3]
        %v232 = vld [vmem:[%s2] sm:$0xff]
        %v233 = vld [vmem:[%s2 + $0x8] sm:$0xff]
        %v234 = vld [vmem:[%s2 + $0x10] sm:$0xff]
        %v235 = vld [vmem:[%s2 + $0x18] sm:$0xff]
        %vm236 = vcmask 261120
        %v238 = vsel %vm236, %v231, 0
        %240 = vmatprep.subr.mxu0 0.0
        %241 = vmatpush1.msra.mxu0 0.0
        %242 = vmatprep.subr.mxu0 0.0
        %243 = vmatpush1.msra.mxu0 0.0
        %244 = vmatprep.subr.mxu0 0.0
        %245 = vmatpush1.msra.mxu0 0.0
        %246 = vmatprep.subr.mxu0 0.0
        %247 = vmatpush1.msra.mxu0 0.0
        %248 = vmatprep.subr.mxu0 0.0
        %249 = vmatpush1.msra.mxu0 0.0
        %250 = vmatprep.subr.mxu0 0.0
        %251 = vmatpush1.msra.mxu0 0.0
        %252 = vmatprep.subr.mxu0 0.0
        %253 = vmatpush1.msra.mxu0 0.0
        %254 = vmatprep.subr.mxu0 0.0
        %255 = vmatpush1.msra.mxu0 0.0
        %256 = vmatprep.subr.mxu0 0.0
        %257 = vmatpush1.msra.mxu0 0.0
        %258 = vmatprep.subr.mxu0 0.0
        %259 = vmatpush1.msra.mxu0 0.0
        %260 = vmatprep.subr.mxu0 0.0
        %261 = vmatpush1.msra.mxu0 0.0
        %262 = vmatprep.subr.mxu0 0.0
        %263 = vmatpush1.msra.mxu0 0.0
        %264 = vmatprep.subr.mxu0 0.0
        %265 = vmatpush1.msra.mxu0 %v230
        %266 = vmatprep.subr.mxu0 0.0
        %267 = vmatpush1.msra.mxu0 %v229
        %268 = vmatprep.subr.mxu0 0.0
        %269 = vmatpush1.msra.mxu0 %v228
        %270 = vmatprep.subr.mxu0 0.0
        %271 = vmatpush1.msra.mxu0 %v227
        %272 = vmatprep.subr.mxu0 0.0
        %273 = vmatpush2.msra.mxu0 0.0
        %274 = vmatprep.subr.mxu0 0.0
        %275 = vmatpush2.msra.mxu0 0.0
        %276 = vmatprep.subr.mxu0 0.0
        %277 = vmatpush2.msra.mxu0 0.0
        %278 = vmatprep.subr.mxu0 0.0
        %279 = vmatpush2.msra.mxu0 0.0
        %280 = vmatprep.subr.mxu0 0.0
        %281 = vmatpush2.msra.mxu0 0.0
        %282 = vmatprep.subr.mxu0 0.0
        %283 = vmatpush2.msra.mxu0 0.0
        %284 = vmatprep.subr.mxu0 0.0
        %285 = vmatpush2.msra.mxu0 0.0
        %286 = vmatprep.subr.mxu0 0.0
        %287 = vmatpush2.msra.mxu0 0.0
        %288 = vmatprep.subr.mxu0 0.0
        %289 = vmatpush2.msra.mxu0 0.0
        %290 = vmatprep.subr.mxu0 0.0
        %291 = vmatpush2.msra.mxu0 0.0
        %292 = vmatprep.subr.mxu0 0.0
        %293 = vmatpush2.msra.mxu0 0.0
        %294 = vmatprep.subr.mxu0 0.0
        %295 = vmatpush2.msra.mxu0 0.0
        %296 = vmatprep.subr.mxu0 0.0
        %297 = vmatpush2.msra.mxu0 0.0
        %298 = vmatprep.subr.mxu0 0.0
        %299 = vmatpush2.msra.mxu0 0.0
        %300 = vmatprep.subr.mxu0 0.0
        %301 = vmatpush2.msra.mxu0 0.0
        %302 = vmatprep.subr.mxu0 0.0
        %303 = vmatpush2.msra.mxu0 0.0
        %304 = vmatprep.mubr.f32.mxu0 0.0
        %305 = vmatmul.mubr.f32.gmra.mxu0 %v238
        %v306 = vpop.f32.mrf.mxu0
        %v307 = vadd.f32 0.0, %v306
        %v308 = vpop.f32.mrf.mxu0
        %309 = vdwg.mxu0
        %v310 = vmax.f32 %v307, 0.0
        %vm311 = vcmask 15360
        %v313 = vsel %vm311, %v232, 0
        %v316 = vsel %vm311, %v233, 0
        %v319 = vsel %vm311, %v234, 0
        %v322 = vsel %vm311, %v235, 0
        %vm324 = vcmask 1041408
        %v326 = vsel %vm324, %v310, 0
        %328 = vmatprep.subr.mxu0 0.0
        %329 = vmatpush1.msra.mxu0 0.0
        %330 = vmatprep.subr.mxu0 0.0
        %331 = vmatpush1.msra.mxu0 0.0
        %332 = vmatprep.subr.mxu0 0.0
        %333 = vmatpush1.msra.mxu0 0.0
        %334 = vmatprep.subr.mxu0 0.0
        %335 = vmatpush1.msra.mxu0 0.0
        %336 = vmatprep.subr.mxu0 0.0
        %337 = vmatpush1.msra.mxu0 0.0
        %338 = vmatprep.subr.mxu0 0.0
        %339 = vmatpush1.msra.mxu0 0.0
        %340 = vmatprep.subr.mxu0 0.0
        %341 = vmatpush1.msra.mxu0 0.0
        %342 = vmatprep.subr.mxu0 0.0
        %343 = vmatpush1.msra.mxu0 0.0
        %344 = vmatprep.subr.mxu0 0.0
        %345 = vmatpush1.msra.mxu0 0.0
        %346 = vmatprep.subr.mxu0 0.0
        %347 = vmatpush1.msra.mxu0 0.0
        %348 = vmatprep.subr.mxu0 0.0
        %349 = vmatpush1.msra.mxu0 0.0
        %350 = vmatprep.subr.mxu0 0.0
        %351 = vmatpush1.msra.mxu0 0.0
        %352 = vmatprep.subr.mxu0 0.0
        %353 = vmatpush1.msra.mxu0 0.0
        %354 = vmatprep.subr.mxu0 0.0
        %355 = vmatpush1.msra.mxu0 0.0
        %356 = vmatprep.subr.mxu0 0.0
        %357 = vmatpush1.msra.mxu0 0.0
        %358 = vmatprep.subr.mxu0 0.0
        %359 = vmatpush1.msra.mxu0 %v326
        %360 = vmatprep.subr.mxu0 0.0
        %361 = vmatpush2.msra.mxu0 0.0
        %362 = vmatprep.subr.mxu0 0.0
        %363 = vmatpush2.msra.mxu0 0.0
        %364 = vmatprep.subr.mxu0 0.0
        %365 = vmatpush2.msra.mxu0 0.0
        %366 = vmatprep.subr.mxu0 0.0
        %367 = vmatpush2.msra.mxu0 0.0
        %368 = vmatprep.subr.mxu0 0.0
        %369 = vmatpush2.msra.mxu0 0.0
        %370 = vmatprep.subr.mxu0 0.0
        %371 = vmatpush2.msra.mxu0 0.0
        %372 = vmatprep.subr.mxu0 0.0
        %373 = vmatpush2.msra.mxu0 0.0
        %374 = vmatprep.subr.mxu0 0.0
        %375 = vmatpush2.msra.mxu0 0.0
        %376 = vmatprep.subr.mxu0 0.0
        %377 = vmatpush2.msra.mxu0 0.0
        %378 = vmatprep.subr.mxu0 0.0
        %379 = vmatpush2.msra.mxu0 0.0
        %380 = vmatprep.subr.mxu0 0.0
        %381 = vmatpush2.msra.mxu0 0.0
        %382 = vmatprep.subr.mxu0 0.0
        %383 = vmatpush2.msra.mxu0 0.0
        %384 = vmatprep.subr.mxu0 0.0
        %385 = vmatpush2.msra.mxu0 0.0
        %386 = vmatprep.subr.mxu0 0.0
        %387 = vmatpush2.msra.mxu0 0.0
        %388 = vmatprep.subr.mxu0 0.0
        %389 = vmatpush2.msra.mxu0 0.0
        %390 = vmatprep.subr.mxu0 0.0
        %391 = vmatpush2.msra.mxu0 0.0
        %392 = vmatprep.mubr.f32.mxu0 0.0
        %393 = vmatmul.mubr.f32.gmra.mxu0 %v313
        %v394 = vpop.f32.mrf.mxu0
        %v395 = vadd.f32 0.0, %v394
        %v396 = vpop.f32.mrf.mxu0
        %397 = vmatprep.mubr.f32.mxu0 0.0
        %398 = vmatmul.mubr.f32.gmra.mxu0 %v316
        %v399 = vpop.f32.mrf.mxu0
        %v400 = vadd.f32 0.0, %v399
        %v401 = vpop.f32.mrf.mxu0
        %402 = vmatprep.mubr.f32.mxu0 0.0
        %403 = vmatmul.mubr.f32.gmra.mxu0 %v319
        %v404 = vpop.f32.mrf.mxu0
        %v405 = vadd.f32 0.0, %v404
        %v406 = vpop.f32.mrf.mxu0
        %407 = vmatprep.mubr.f32.mxu0 0.0
        %408 = vmatmul.mubr.f32.gmra.mxu0 %v322
        %v409 = vpop.f32.mrf.mxu0
        %v410 = vadd.f32 0.0, %v409
        %v411 = vpop.f32.mrf.mxu0
        %412 = vdwg.mxu0
        %417 = vrot.lane.b32.xlu0 %v395, 127
        %v418 = vpop.permute.xlu0 %417
        %419 = vrot.lane.b32.xlu0 %v400, 127
        %v420 = vpop.permute.xlu0 %419
        %421 = vrot.lane.b32.xlu0 %v405, 127
        %v422 = vpop.permute.xlu0 %421
        %423 = vrot.lane.b32.xlu0 %v410, 127
        %v424 = vpop.permute.xlu0 %423
        %v429 = vadd.f32 %v395, %v418
        %v430 = vadd.f32 %v400, %v420
        %v431 = vadd.f32 %v405, %v422
        %v432 = vadd.f32 %v410, %v424
        %v433 = vxor.u32 %v429, 2147483648
        %v434 = vxor.u32 %v430, 2147483648
        %v435 = vxor.u32 %v431, 2147483648
        %v436 = vxor.u32 %v432, 2147483648
        %v437 = vmul.f32 %v433, 1.442695
        %v438 = vpow.pop %v437
        %v439 = vmul.f32 %v434, 1.442695
        %v440 = vpow.pop %v439
        %v441 = vmul.f32 %v435, 1.442695
        %v442 = vpow.pop %v441
        %v443 = vmul.f32 %v436, 1.442695
        %v444 = vpow.pop %v443
        %v445 = vadd.f32 %v438, 1.0
        %v446 = vadd.f32 %v440, 1.0
        %v447 = vadd.f32 %v442, 1.0
        %v448 = vadd.f32 %v444, 1.0
        %v449 = vrcp.pop %v445
        %v450 = vmul.f32 1.0, %v449
        %v451 = vrcp.pop %v446
        %v452 = vmul.f32 1.0, %v451
        %v453 = vrcp.pop %v447
        %v454 = vmul.f32 1.0, %v453
        %v455 = vrcp.pop %v448
        %v456 = vmul.f32 1.0, %v455
        %458 = vset.pattern.permute.xlu0 0
        %459 = vperm.xlu0 %458, %v450
        %v460 = vpop.permute.xlu0 %459
        %463 = vset.pattern.permute.xlu0 0
        %464 = vperm.xlu0 %463, %v452
        %v465 = vpop.permute.xlu0 %464
        %468 = vset.pattern.permute.xlu0 0
        %469 = vperm.xlu0 %468, %v454
        %v470 = vpop.permute.xlu0 %469
        %473 = vset.pattern.permute.xlu0 0
        %474 = vperm.xlu0 %473, %v456
        %v475 = vpop.permute.xlu0 %474
        %v477 = vmul.f32 %v189, %v460
        %v478 = vmul.f32 %v190, %v460
        %v479 = vmul.f32 %v191, %v465
        %v480 = vmul.f32 %v192, %v465
        %v481 = vmul.f32 %v193, %v470
        %v482 = vmul.f32 %v194, %v470
        %v483 = vmul.f32 %v195, %v475
        %v484 = vmul.f32 %v196, %v475
        %485 = vst [vmem:[%s188] sm:$0xff] %v477
        %486 = vst [vmem:[%s188 + $0x8] sm:$0xff] %v478
        %487 = vst [vmem:[%s188 + $0x10] sm:$0xff] %v479
        %488 = vst [vmem:[%s188 + $0x18] sm:$0xff] %v480
        %489 = vst [vmem:[%s188 + $0x20] sm:$0xff] %v481
        %490 = vst [vmem:[%s188 + $0x28] sm:$0xff] %v482
        %491 = vst [vmem:[%s188 + $0x30] sm:$0xff] %v483
        %492 = vst [vmem:[%s188 + $0x38] sm:$0xff] %v484
        %s493 = sand.u32 %s96, 1
        %s494 = scalar_lea.sflag [#allocation4], %s493
        %s495 = sand.u32 %s96, 1
        %s496 = smul.addr %s495, 64
        %s497 = scalar_lea.vmem [#allocation5], %s496
        // Predicated region
        $region37: #{tpu_custom_call.1} parent=31 // pred_check
          %p498 = pneg %p106
        $region38: #{tpu_custom_call.1} parent=31 // pred_check_branch
          %500 = sbr.rel (%p498) target = $region40
        $region39: #{tpu_custom_call.1} parent=31 // pred_region
          %s502 = ssub.s32 1024, 1024
          %503 = vsyncadd %s494, %s502
          %s504 = smul.addr %s20, 8
          %s505 = smul.addr %s504, 128
          %s506 = scalar_lea.hbm %s3, %s505
          %s507 = sshll.u32 %s497, 4
          %s508 = int_to_ptr.vmem [resolvable:$true] %s507
          %513 = dma.vmem_to_hbm [thread:$0]  %s508, 1024, %s506, %s494, 256, 256, 16
        $region40: #{tpu_custom_call.1} parent=31 // pred_fallthru
          _
      $region32: #{tpu_custom_call.1} parent=5 // pred_fallthru
        _
      %p514 = scmp.le.s32.totalorder 2, %s15
      // Predicated region
      $region41: #{tpu_custom_call.1} parent=5 // pred_check
        %p515 = pneg %p514
      $region42: #{tpu_custom_call.1} parent=5 // pred_check_branch
        %517 = sbr.rel (%p515) target = $region44
      $region43: #{tpu_custom_call.1} parent=5 // pred_region
        %s518 = ssub.s32 %s15, 2
        // Predicated region
        $region45: #{tpu_custom_call.1} parent=43 // pred_check
          %p519 = pneg %p112
        $region46: #{tpu_custom_call.1} parent=43 // pred_check_branch
          %521 = sbr.rel (%p519) target = $region48
        $region47: #{tpu_custom_call.1} parent=43 // pred_region
          %s522 = sand.u32 %s97, 1
          %s523 = scalar_lea.sflag [#allocation4], %s522
          %s524 = sand.u32 %s97, 1
          %s525 = smul.addr %s524, 64
          %s526 = scalar_lea.vmem [#allocation5], %s525
          %527 = dma.done %s523, 1024
        $region48: #{tpu_custom_call.1} parent=43 // pred_fallthru
          _
      $region44: #{tpu_custom_call.1} parent=5 // pred_fallthru
        _
    $region6: #{tpu_custom_call.1} parent=1 // loop_footer
      %s19 = sadd.s32 1, %s15
    $region7: #{tpu_custom_call.1} parent=1 // loop_footer_branch
      %14 = sbr.rel target = $region3
    $region8: #{tpu_custom_call.1} parent=1 // loop_exit
      _
    %528 = vsyncpa [#allocation3], 1
    %s529 = scalar_lea.sflag [#allocation3], 1
    %530 = vsyncpa %s529, 1
    %531 = vsyncpa [#allocation4], 1
    %s532 = scalar_lea.sflag [#allocation4], 1
    %533 = vsyncpa %s532, 1

</llo_original>
